<compile_context>
chip_gen: v7x
topology: tpu7x:2x2x1
jax: 0.10.0
libtpu: 0.0.40
codegen_flags: <defaults>
</compile_context>

<pallas_src>
import functools

import jax
import jax.numpy as jnp
from jax import lax
from jax.experimental import pallas as pl
from jax.experimental.pallas import tpu as pltpu


def _round_up(n, m):
    return ((n + m - 1) // m) * m


def _pad_axis(a, axis, new_size):
    pad = new_size - a.shape[axis]
    if pad == 0:
        return a
    cfg = [(0, 0)] * a.ndim
    cfg[axis] = (0, pad)
    return jnp.pad(a, cfg)


# ---------------------------------------------------------------------------
# Kernel 1: hoisted input projection   pre = x @ wx + bx   (all T at once)
# ---------------------------------------------------------------------------
def _x2g_kernel(x_ref, wx_ref, bx_ref, pre_ref):
    x = x_ref[...].astype(jnp.bfloat16)                       # (RB, D)
    pre = jnp.dot(x, wx_ref[...], preferred_element_type=jnp.float32)
    pre_ref[...] = pre + bx_ref[...]                          # (RB, 4Hp) f32


# ---------------------------------------------------------------------------
# Kernel 2: the recurrence (T_CHUNK steps per grid iteration)
# ---------------------------------------------------------------------------
def _lstm_recurrent_kernel(pre_ref, wp_ref, gnw_ref, gnb_ref, cnw_ref, cnb_ref,
                           h0_ref, c0_ref,
                           y_ref, hfin_ref, cfin_ref,
                           h_scr, c_scr, *,
                           hp, n_gate, n_cell, t_chunk, seq_len, eps,
                           mask_tail):
    tc = pl.program_id(1)          # time-chunk index (innermost, "arbitrary")

    @pl.when(tc == 0)
    def _():
        h_scr[...] = h0_ref[...].astype(jnp.float32)
        c_scr[...] = c0_ref[...].astype(jnp.float32)

    # Loaded once per chunk, reused across all unrolled steps.
    wp = wp_ref[...]               # (Hp, 4Hp) bf16
    gnw = gnw_ref[...]
    gnb = gnb_ref[...]
    cnw = cnw_ref[...]
    cnb = cnb_ref[...]

    inv_g = jnp.float32(1.0 / n_gate)    # true (unpadded) 4*H
    inv_c = jnp.float32(1.0 / n_cell)    # true (unpadded) H

    def step(s, carry):
        h, c = carry
        # gates = precomputed x-projection + recurrent projection (bf16 MXU).
        g = pre_ref[s] + jnp.dot(h.astype(jnp.bfloat16), wp,
                                 preferred_element_type=jnp.float32)

        # g_norm: single-pass stats.  Padded gate columns are exactly zero,
        # so sums over the padded width equal sums over the true 4*H features.
        gs = jnp.sum(g, axis=-1, keepdims=True)
        gss = jnp.sum(g * g, axis=-1, keepdims=True)
        mu = gs * inv_g
        var = gss * inv_g - mu * mu
        g = (g - mu) * lax.rsqrt(var + eps) * gnw + gnb

        i_g = jax.nn.sigmoid(g[:, 0:hp])
        f_g = jax.nn.sigmoid(g[:, hp:2 * hp])
        c_g = jnp.tanh(g[:, 2 * hp:3 * hp])
        o_g = jax.nn.sigmoid(g[:, 3 * hp:4 * hp])

        c_new = f_g * c + i_g * c_g

        # c_norm: single-pass stats (padded cell columns stay exactly zero).
        cs = jnp.sum(c_new, axis=-1, keepdims=True)
        css = jnp.sum(c_new * c_new, axis=-1, keepdims=True)
        mu_c = cs * inv_c
        var_c = css * inv_c - mu_c * mu_c
        c_new = (c_new - mu_c) * lax.rsqrt(var_c + eps) * cnw + cnb

        h_new = o_g * jnp.tanh(c_new)
        y_ref[s] = h_new.astype(y_ref.dtype)

        if mask_tail:
            # Freeze the carried state on padded tail steps (t >= seq_len).
            valid = ((tc * t_chunk + s) < seq_len).astype(jnp.float32)
            h_new = h + valid * (h_new - h)
            c_new = c + valid * (c_new - c)
        return h_new, c_new

    h, c = lax.fori_loop(0, t_chunk, step, (h_scr[...], c_scr[...]),
                         unroll=True)
    h_scr[...] = h
    c_scr[...] = c

    @pl.when(tc == pl.num_programs(1) - 1)
    def _():
        hfin_ref[...] = h.astype(hfin_ref.dtype)
        cfin_ref[...] = c.astype(cfin_ref.dtype)


# ---------------------------------------------------------------------------
# Wrapper
# ---------------------------------------------------------------------------
def rnnt_custom_lstm(x, params, state=None, *, eps=1e-5, t_chunk=16,
                     b_block=None, vmem_limit_bytes=None):
    """Pallas implementation of RNNTCustomLSTM.forward.

    x:      (T, B, D) float32
    params: dict with
        wx  (D, 4H)    -- x2g weight, transposed (y = x @ wx + bx)
        bx  (4H,)      -- x2g bias (optional; absent when layer_norm=True)
        wp  (H, 4H)    -- p2g weight, transposed, no bias
        gnw, gnb (4H,) -- g_norm LayerNorm params
        cnw, cnb (H,)  -- c_norm LayerNorm params
    state: optional (h0, c0), each (B, H).  None -> zeros.
    Returns (y, (h_final, c_final)) with y: (T, B, H).
    """
    T, B, D = x.shape
    H = params["cnw"].shape[0]
    assert params["wp"].shape == (H, 4 * H)
    assert params["wx"].shape == (D, 4 * H)

    # ---- padded sizes -----------------------------------------------------
    Hp = _round_up(H, 128)                 # lane-aligned hidden dim
    Gp = 4 * Hp
    if b_block is None:
        Bp = _round_up(B, 8)
        b_block = Bp
    else:
        b_block = _round_up(b_block, 8)
        Bp = _round_up(B, b_block)
    # Clip the time chunk to the sequence length so short sequences don't pay
    # for fully-masked tail steps.
    t_chunk = max(1, min(int(t_chunk), T))
    Tp = _round_up(T, t_chunk)
    n_tc = Tp // t_chunk

    def pad_gates(w):
        # (..., 4H) -> (..., 4Hp): zero-pad each of the 4 gate sections to Hp.
        w = w.reshape(w.shape[:-1] + (4, H))
        w = _pad_axis(w, -1, Hp)
        return w.reshape(w.shape[:-2] + (4 * Hp,))

    # ---- parameters (zero-padded; matmul operands in bf16) ----------------
    wx = pad_gates(params["wx"]).astype(jnp.bfloat16)                 # (D, 4Hp)
    wp = pad_gates(params["wp"])                                      # (H, 4Hp)
    wp = _pad_axis(wp, 0, Hp).astype(jnp.bfloat16)                    # (Hp, 4Hp)

    bx = params.get("bx")
    if bx is None:
        bx = jnp.zeros((4 * H,), jnp.float32)
    bx = pad_gates(bx.astype(jnp.float32)).reshape(1, Gp)
    gnw = pad_gates(params["gnw"].astype(jnp.float32)).reshape(1, Gp)
    gnb = pad_gates(params["gnb"].astype(jnp.float32)).reshape(1, Gp)
    cnw = _pad_axis(params["cnw"].astype(jnp.float32).reshape(1, H), 1, Hp)
    cnb = _pad_axis(params["cnb"].astype(jnp.float32).reshape(1, H), 1, Hp)

    if state is None:
        h0 = jnp.zeros((Bp, Hp), x.dtype)
        c0 = jnp.zeros((Bp, Hp), x.dtype)
    else:
        h0, c0 = state
        h0 = _pad_axis(_pad_axis(h0, 0, Bp), 1, Hp)
        c0 = _pad_axis(_pad_axis(c0, 0, Bp), 1, Hp)

    xp = _pad_axis(_pad_axis(x, 0, Tp), 1, Bp)                        # (Tp,Bp,D)

    compiler_kwargs = {}
    if vmem_limit_bytes is not None:
        compiler_kwargs["vmem_limit_bytes"] = int(vmem_limit_bytes)

    # ---- Kernel 1: hoisted x2g projection over all (padded) steps ---------
    # Pick the largest x2g time-block (multiple of t_chunk dividing Tp) whose
    # per-buffer footprint (x block + pre block, f32) stays under ~2 MiB, so
    # long sequences get few, large, MXU-friendly grid steps.
    rows = Tp * Bp
    budget = 2 * 1024 * 1024
    per_chunk_bytes = t_chunk * Bp * (D + Gp) * 4
    k_max = max(1, budget // max(per_chunk_bytes, 1))
    k = max(c for c in range(1, n_tc + 1) if n_tc % c == 0 and c <= k_max)
    tx = k * t_chunk                      # time steps per x2g grid block
    rb = tx * Bp                          # rows per grid block (MXU-tall M)

    x2d = xp.reshape(rows, D)
    pre = pl.pallas_call(
        _x2g_kernel,
        out_shape=jax.ShapeDtypeStruct((rows, Gp), jnp.float32),
        grid_spec=pltpu.PrefetchScalarGridSpec(
            num_scalar_prefetch=0,
            grid=(rows // rb,),
            in_specs=[
                pl.BlockSpec((rb, D), lambda i: (i, 0)),
                pl.BlockSpec((D, Gp), lambda i: (0, 0)),
                pl.BlockSpec((1, Gp), lambda i: (0, 0)),
            ],
            out_specs=pl.BlockSpec((rb, Gp), lambda i: (i, 0)),
        ),
        compiler_params=pltpu.CompilerParams(
            dimension_semantics=("parallel",), **compiler_kwargs),
    )(x2d, wx, bx)
    pre = pre.reshape(Tp, Bp, Gp)

    # ---- Kernel 2: recurrence ---------------------------------------------
    n_b = Bp // b_block
    kernel = functools.partial(
        _lstm_recurrent_kernel,
        hp=Hp, n_gate=4 * H, n_cell=H, t_chunk=t_chunk, seq_len=T, eps=eps,
        mask_tail=(Tp != T))

    y, hfin, cfin = pl.pallas_call(
        kernel,
        out_shape=(
            jax.ShapeDtypeStruct((Tp, Bp, Hp), x.dtype),
            jax.ShapeDtypeStruct((Bp, Hp), x.dtype),
            jax.ShapeDtypeStruct((Bp, Hp), x.dtype),
        ),
        grid_spec=pltpu.PrefetchScalarGridSpec(
            num_scalar_prefetch=0,
            grid=(n_b, n_tc),
            in_specs=[
                pl.BlockSpec((t_chunk, b_block, Gp), lambda b, t: (t, b, 0)),
                pl.BlockSpec((Hp, Gp), lambda b, t: (0, 0)),     # wp
                pl.BlockSpec((1, Gp), lambda b, t: (0, 0)),      # gnw
                pl.BlockSpec((1, Gp), lambda b, t: (0, 0)),      # gnb
                pl.BlockSpec((1, Hp), lambda b, t: (0, 0)),      # cnw
                pl.BlockSpec((1, Hp), lambda b, t: (0, 0)),      # cnb
                pl.BlockSpec((b_block, Hp), lambda b, t: (b, 0)),  # h0
                pl.BlockSpec((b_block, Hp), lambda b, t: (b, 0)),  # c0
            ],
            out_specs=[
                pl.BlockSpec((t_chunk, b_block, Hp), lambda b, t: (t, b, 0)),
                pl.BlockSpec((b_block, Hp), lambda b, t: (b, 0)),
                pl.BlockSpec((b_block, Hp), lambda b, t: (b, 0)),
            ],
            scratch_shapes=[
                pltpu.VMEM((b_block, Hp), jnp.float32),          # h carry
                pltpu.VMEM((b_block, Hp), jnp.float32),          # c carry
            ],
        ),
        compiler_params=pltpu.CompilerParams(
            dimension_semantics=("parallel", "arbitrary"), **compiler_kwargs),
    )(pre, wp, gnw, gnb, cnw, cnb, h0, c0)

    y = y[:T, :B, :H]
    h_final = hfin[:B, :H]
    c_final = cfin[:B, :H]
    return y, (h_final, c_final)


# ---------------------------------------------------------------------------
# Pure-JAX reference (f32), matching the PyTorch module semantics.
# ---------------------------------------------------------------------------
def rnnt_custom_lstm_ref(x, params, state=None, *, eps=1e-5):
    T, B, D = x.shape
    H = params["cnw"].shape[0]
    if state is None:
        h = jnp.zeros((B, H), x.dtype)
        c = jnp.zeros((B, H), x.dtype)
    else:
        h, c = state

    bx = params.get("bx")
    if bx is None:
        bx = jnp.zeros((4 * H,), x.dtype)

    def ln(v, w, b):
        mu = jnp.mean(v, axis=-1, keepdims=True)
        var = jnp.mean(jnp.square(v - mu), axis=-1, keepdims=True)
        return (v - mu) * lax.rsqrt(var + eps) * w + b

    def step(carry, xt):
        h, c = carry
        g = xt @ params["wx"] + bx + h @ params["wp"]
        g = ln(g, params["gnw"], params["gnb"])
        i_g, f_g, c_g, o_g = jnp.split(g, 4, axis=1)
        i_g = jax.nn.sigmoid(i_g)
        f_g = jax.nn.sigmoid(f_g)
        c_g = jnp.tanh(c_g)
        o_g = jax.nn.sigmoid(o_g)
        c = f_g * c + i_g * c_g
        c = ln(c, params["cnw"], params["cnb"])
        h = o_g * jnp.tanh(c)
        return (h, c), h

    (h, c), ys = lax.scan(step, (h, c), x)
    return ys, (h, c)


if __name__ == "__main__":
    def make_params(key, D, H):
        k = jax.random.split(key, 7)
        return {
            "wx": 0.1 * jax.random.normal(k[0], (D, 4 * H), jnp.float32),
            "bx": 0.1 * jax.random.normal(k[1], (4 * H,), jnp.float32),
            "wp": 0.1 * jax.random.normal(k[2], (H, 4 * H), jnp.float32),
            "gnw": 1.0 + 0.1 * jax.random.normal(k[3], (4 * H,), jnp.float32),
            "gnb": 0.1 * jax.random.normal(k[4], (4 * H,), jnp.float32),
            "cnw": 1.0 + 0.1 * jax.random.normal(k[5], (H,), jnp.float32),
            "cnb": 0.1 * jax.random.normal(k[6], (H,), jnp.float32),
        }

    # bf16 MXU operands vs the pure-f32 reference -> allow ~1e-2-level drift.
    tol = dict(rtol=5e-2, atol=5e-2)
    key = jax.random.PRNGKey(0)

    # --- Config 1: zero initial state, T divisible by the time chunk --------
    T, B, D, H = 8, 4, 16, 32
    k1, k2, key = jax.random.split(key, 3)
    x = jax.random.normal(k1, (T, B, D), jnp.float32)
    params = make_params(k2, D, H)

    y, (h_f, c_f) = rnnt_custom_lstm(x, params, state=None)
    jax.block_until_ready(y)
    jax.block_until_ready(c_f)
    y_ref, (h_ref, c_ref) = rnnt_custom_lstm_ref(x, params, state=None)
    assert jnp.allclose(y, y_ref, **tol), "config1 output mismatch"
    assert jnp.allclose(h_f, h_ref, **tol), "config1 hidden state mismatch"
    assert jnp.allclose(c_f, c_ref, **tol), "config1 cell state mismatch"

    # --- Config 2: ragged T/B/H (padding + tail masking + multi-chunk carry)
    T, B, D, H = 5, 3, 12, 20
    k1, k2, k3, k4, key = jax.random.split(key, 5)
    x = jax.random.normal(k1, (T, B, D), jnp.float32)
    params = make_params(k2, D, H)
    state = (0.5 * jax.random.normal(k3, (B, H), jnp.float32),
             0.5 * jax.random.normal(k4, (B, H), jnp.float32))

    # t_chunk=4 forces Tp=8 > T=5: exercises tail masking and the cross-chunk
    # h/c carry in VMEM scratch.
    y, (h_f, c_f) = rnnt_custom_lstm(x, params, state=state, t_chunk=4)
    jax.block_until_ready(y)
    jax.block_until_ready(c_f)
    y_ref, (h_ref, c_ref) = rnnt_custom_lstm_ref(x, params, state=state)
    assert jnp.allclose(y, y_ref, **tol), "config2 output mismatch"
    assert jnp.allclose(h_f, h_ref, **tol), "config2 hidden state mismatch"
    assert jnp.allclose(c_f, c_ref, **tol), "config2 cell state mismatch"

    print("KERNEL_OK")
</pallas_src>

<mosaic_0001>
module attributes {stable_mosaic.version = 11 : i64} {
  func.func @_x2g_kernel(%arg0: i32, %arg1: memref<64x16xf32, #tpu.memory_space<vmem>>, %arg2: memref<16x512xbf16, #tpu.memory_space<vmem>>, %arg3: memref<1x512xf32, #tpu.memory_space<vmem>>, %arg4: memref<64x512xf32, #tpu.memory_space<vmem>>) attributes {dimension_semantics = [#tpu.dimension_semantics<parallel>], iteration_bounds = array<i64: 1>, scalar_prefetch = 0 : i64, scratch_operands = 0 : i64, tpu.core_type = #tpu.core_type<tc>, window_params = [{transform_indices = @transform_0, window_bounds = array<i64: 64, 16>}, {pipeline_mode = #tpu.pipeline_mode<synchronous>, transform_indices = @transform_1, window_bounds = array<i64: 16, 512>}, {pipeline_mode = #tpu.pipeline_mode<synchronous>, transform_indices = @transform_2, window_bounds = array<i64: 1, 512>}, {transform_indices = @transform_3, window_bounds = array<i64: 64, 512>}]} {
    %c0 = arith.constant 0 : index
    %c0_0 = arith.constant 0 : index
    %0 = vector.load %arg1[%c0, %c0_0] : memref<64x16xf32, #tpu.memory_space<vmem>>, vector<64x16xf32>
    %1 = arith.truncf %0 : vector<64x16xf32> to vector<64x16xbf16>
    %c0_1 = arith.constant 0 : index
    %c0_2 = arith.constant 0 : index
    %2 = vector.load %arg2[%c0_1, %c0_2] : memref<16x512xbf16, #tpu.memory_space<vmem>>, vector<16x512xbf16>
    %cst = arith.constant dense<0.000000e+00> : vector<64x512xf32>
    %3 = tpu.matmul %1, %2, %cst {dimension_numbers = #tpu.dot_dimension_numbers<[1], [0], [0], [1], [0, 0, 1, 1], [], []>} : vector<64x16xbf16>, vector<16x512xbf16>, vector<64x512xf32> -> vector<64x512xf32>
    %c0_3 = arith.constant 0 : index
    %c0_4 = arith.constant 0 : index
    %4 = vector.load %arg3[%c0_3, %c0_4] : memref<1x512xf32, #tpu.memory_space<vmem>>, vector<1x512xf32>
    %5 = vector.broadcast %4 : vector<1x512xf32> to vector<64x512xf32>
    %6 = arith.addf %3, %5 : vector<64x512xf32>
    %c0_5 = arith.constant 0 : index
    %c0_6 = arith.constant 0 : index
    %7 = vector.load %arg4[%c0_5, %c0_6] : memref<64x512xf32, #tpu.memory_space<vmem>>, vector<64x512xf32>
    tpu.vector_store %arg4[%c0_5, %c0_6], %6 {strides = array<i32>} : memref<64x512xf32, #tpu.memory_space<vmem>>, vector<64x512xf32>,
    return
  }
  func.func @transform_0(%arg0: i32) -> (i32, i32) {
    %c0_i32 = arith.constant 0 : i32
    %c0_i32_0 = arith.constant 0 : i32
    return %arg0, %c0_i32 : i32, i32
  }
  func.func @transform_1(%arg0: i32) -> (i32, i32) {
    %c0_i32 = arith.constant 0 : i32
    %c0_i32_0 = arith.constant 0 : i32
    %c0_i32_1 = arith.constant 0 : i32
    return %c0_i32, %c0_i32_0 : i32, i32
  }
  func.func @transform_2(%arg0: i32) -> (i32, i32) {
    %c0_i32 = arith.constant 0 : i32
    %c0_i32_0 = arith.constant 0 : i32
    %c0_i32_1 = arith.constant 0 : i32
    return %c0_i32, %c0_i32_0 : i32, i32
  }
  func.func @transform_3(%arg0: i32) -> (i32, i32) {
    %c0_i32 = arith.constant 0 : i32
    %c0_i32_0 = arith.constant 0 : i32
    return %arg0, %c0_i32 : i32, i32
  }
}

</mosaic_0001>

<llo_original>
// kernel: tpu_custom_call.1
$region0: #{tpu_custom_call.1}
  #allocation0 [shape = 'u32[]', space=smem, size = 0x4, offset = 0x4, fixed_abs, tag = 'smem constant byte address 0x4 - core index']
  #allocation1 [shape = 'u32[144,128]{1,0:T(1,128)}', space=vmem, size = 0x12000, scoped, tag = 'internal scratch']
  %s0 = inlined_call_operand.vmem [shape: f32[64,16], index: 0, kind: input, shape index: {}]
  %s1 = inlined_call_operand.vmem [shape: bf16[16,512], index: 1, kind: input, shape index: {}]
  %s2 = inlined_call_operand.vmem [shape: f32[1,512], index: 2, kind: input, shape index: {}]
  %s3 = inlined_call_operand.hbm [shape: f32[64,512], index: 3, kind: output, shape index: {}]
  %s4 = sld [smem:[#allocation0]]
  $region22: #{tpu_custom_call.1} parent=0
    _
  %s6 = ssub.s32 1, %s4
  %s7 = scalar_select 0, %s6, %s4
  $region1: #{tpu_custom_call.1} parent=0
    #allocation2 [shape = 'u8[131072]{0}', space=vmem, size = 0x20000, scoped, tag = 'output window, operand 0, single buffered']
    #allocation3 [shape = 's32[1]{0}', space=sflag, size = 0x4, scoped, tag = 'scoped memory for tpu_custom_call.1']
    %8 = vsyncpa [#allocation3], 0
    // Predicated region
    $region2: #{tpu_custom_call.1} parent=1 // pred_check
      _
    $region3: #{tpu_custom_call.1} parent=1 // pred_check_branch
      %10 = sbr.rel (0) target = $region5
    $region4: #{tpu_custom_call.1} parent=1 // pred_region
      _
    $region5: #{tpu_custom_call.1} parent=1 // pred_fallthru
      _
    // Predicated region
    $region6: #{tpu_custom_call.1} parent=1 // pred_check
      _
    $region7: #{tpu_custom_call.1} parent=1 // pred_check_branch
      %12 = sbr.rel (0) target = $region9
    $region8: #{tpu_custom_call.1} parent=1 // pred_region
      _
    $region9: #{tpu_custom_call.1} parent=1 // pred_fallthru
      _
    // Predicated region
    $region10: #{tpu_custom_call.1} parent=1 // pred_check
      _
    $region11: #{tpu_custom_call.1} parent=1 // pred_check_branch
      %14 = sbr.rel (0) target = $region13
    $region12: #{tpu_custom_call.1} parent=1 // pred_region
      _
    $region13: #{tpu_custom_call.1} parent=1 // pred_fallthru
      _
    %v16 = vld [vmem:[%s0] sm:$0xff]
    %v17 = vld [vmem:[%s0 + $0x8] sm:$0xff]
    %v18 = vld [vmem:[%s0 + $0x10] sm:$0xff]
    %v19 = vld [vmem:[%s0 + $0x18] sm:$0xff]
    %v20 = vld [vmem:[%s0 + $0x20] sm:$0xff]
    %v21 = vld [vmem:[%s0 + $0x28] sm:$0xff]
    %v22 = vld [vmem:[%s0 + $0x30] sm:$0xff]
    %v23 = vld [vmem:[%s0 + $0x38] sm:$0xff]
    %v24 = vpack.c.bf16 %v17, %v16
    %v25 = vpack.c.bf16 %v19, %v18
    %v26 = vpack.c.bf16 %v21, %v20
    %v27 = vpack.c.bf16 %v23, %v22
    %v28 = vld [vmem:[%s1] sm:$0xff]
    %v29 = vld [vmem:[%s1 + $0x8] sm:$0xff]
    %v30 = vld [vmem:[%s1 + $0x10] sm:$0xff]
    %v31 = vld [vmem:[%s1 + $0x18] sm:$0xff]
    %v32 = vld [vmem:[%s2] sm:$0xf]
    %v34 = vlaneseq
    %v35 = vshrl.u32 %v34, 7
    %v36 = vsub.s32 0, %v35
    %v37 = vrot.slane %v32, %v36
    %v38 = vlaneseq
    %v39 = vshrl.u32 %v38, 7
    %v40 = vsub.s32 1, %v39
    %v41 = vrot.slane %v32, %v40
    %v42 = vlaneseq
    %v43 = vshrl.u32 %v42, 7
    %v44 = vsub.s32 2, %v43
    %v45 = vrot.slane %v32, %v44
    %v46 = vlaneseq
    %v47 = vshrl.u32 %v46, 7
    %v48 = vsub.s32 3, %v47
    %v49 = vrot.slane %v32, %v48
    %v58 = vunpack.c.l.b16 %v28
    %v59 = vunpack.c.h.b16 %v28
    %v60 = vunpack.c.l.b16 %v29
    %v61 = vunpack.c.h.b16 %v29
    %v62 = vunpack.c.l.b16 %v30
    %v63 = vunpack.c.h.b16 %v30
    %v64 = vunpack.c.l.b16 %v31
    %v65 = vunpack.c.h.b16 %v31
    %v66 = vpack.c.b16 %v62, %v58
    %v67 = vpack.c.b16 %v63, %v59
    %v68 = vpack.c.b16 %v64, %v60
    %v69 = vpack.c.b16 %v65, %v61
    %vm74 = vcmask 130048
    %v76 = vsel %vm74, %v24, 0
    %v79 = vsel %vm74, %v25, 0
    %v82 = vsel %vm74, %v26, 0
    %v85 = vsel %vm74, %v27, 0
    %87 = vmatprep.subr.bf16.mxu0 %v67
    %88 = vmatpush1.bf16.msra.mxu0 %v66
    %89 = vmatprep.subr.bf16.mxu0 0
    %90 = vmatpush1.bf16.msra.mxu0 0
    %91 = vmatprep.subr.bf16.mxu0 0
    %92 = vmatpush1.bf16.msra.mxu0 0
    %93 = vmatprep.subr.bf16.mxu0 0
    %94 = vmatpush1.bf16.msra.mxu0 0
    %95 = vmatprep.subr.bf16.mxu0 0
    %96 = vmatpush1.bf16.msra.mxu0 0
    %97 = vmatprep.subr.bf16.mxu0 0
    %98 = vmatpush1.bf16.msra.mxu0 0
    %99 = vmatprep.subr.bf16.mxu0 0
    %100 = vmatpush1.bf16.msra.mxu0 0
    %101 = vmatprep.subr.bf16.mxu0 0
    %102 = vmatpush1.bf16.msra.mxu0 0
    %103 = vmatprep.subr.bf16.mxu0 0
    %104 = vmatpush1.bf16.msra.mxu0 0
    %105 = vmatprep.subr.bf16.mxu0 0
    %106 = vmatpush1.bf16.msra.mxu0 0
    %107 = vmatprep.subr.bf16.mxu0 0
    %108 = vmatpush1.bf16.msra.mxu0 0
    %109 = vmatprep.subr.bf16.mxu0 0
    %110 = vmatpush1.bf16.msra.mxu0 0
    %111 = vmatprep.subr.bf16.mxu0 0
    %112 = vmatpush1.bf16.msra.mxu0 0
    %113 = vmatprep.subr.bf16.mxu0 0
    %114 = vmatpush1.bf16.msra.mxu0 0
    %115 = vmatprep.subr.bf16.mxu0 0
    %116 = vmatpush1.bf16.msra.mxu0 0
    %117 = vmatprep.subr.bf16.mxu0 0
    %118 = vmatpush1.bf16.msra.mxu0 0
    %119 = vmatprep.mubr.bf16.mxu0 0
    %120 = vmatmul.mubr.bf16.gmra.mrb[0].mxu0 %v76
    %v121 = vpop.f32.mrb[0].mxu0
    %v122 = vadd.f32 %v37, %v121
    %v123 = vpop.f32.mrb[0].mxu0
    %v124 = vadd.f32 %v41, %v123
    %v125 = vpop.f32.mrb[0].mxu0
    %v126 = vadd.f32 %v37, %v125
    %v127 = vpop.f32.mrb[0].mxu0
    %v128 = vadd.f32 %v41, %v127
    %129 = vmatprep.mubr.bf16.mxu0 0
    %130 = vmatmul.mubr.bf16.gmra.mrb[0].mxu0 %v79
    %v131 = vpop.f32.mrb[0].mxu0
    %v132 = vadd.f32 %v37, %v131
    %v133 = vpop.f32.mrb[0].mxu0
    %v134 = vadd.f32 %v41, %v133
    %v135 = vpop.f32.mrb[0].mxu0
    %v136 = vadd.f32 %v37, %v135
    %v137 = vpop.f32.mrb[0].mxu0
    %v138 = vadd.f32 %v41, %v137
    %139 = vmatprep.mubr.bf16.mxu0 0
    %140 = vmatmul.mubr.bf16.gmra.mrb[0].mxu0 %v82
    %v141 = vpop.f32.mrb[0].mxu0
    %v142 = vadd.f32 %v37, %v141
    %v143 = vpop.f32.mrb[0].mxu0
    %v144 = vadd.f32 %v41, %v143
    %v145 = vpop.f32.mrb[0].mxu0
    %v146 = vadd.f32 %v37, %v145
    %v147 = vpop.f32.mrb[0].mxu0
    %v148 = vadd.f32 %v41, %v147
    %149 = vmatprep.mubr.bf16.mxu0 0
    %150 = vmatmul.mubr.bf16.gmra.mrb[0].mxu0 %v85
    %v151 = vpop.f32.mrb[0].mxu0
    %v152 = vadd.f32 %v37, %v151
    %v153 = vpop.f32.mrb[0].mxu0
    %v154 = vadd.f32 %v41, %v153
    %v155 = vpop.f32.mrb[0].mxu0
    %v156 = vadd.f32 %v37, %v155
    %v157 = vpop.f32.mrb[0].mxu0
    %v158 = vadd.f32 %v41, %v157
    %159 = vdwg.mxu0
    %160 = vmatprep.subr.bf16.mxu0 %v69
    %161 = vmatpush1.bf16.msra.mxu0 %v68
    %162 = vmatprep.subr.bf16.mxu0 0
    %163 = vmatpush1.bf16.msra.mxu0 0
    %164 = vmatprep.subr.bf16.mxu0 0
    %165 = vmatpush1.bf16.msra.mxu0 0
    %166 = vmatprep.subr.bf16.mxu0 0
    %167 = vmatpush1.bf16.msra.mxu0 0
    %168 = vmatprep.subr.bf16.mxu0 0
    %169 = vmatpush1.bf16.msra.mxu0 0
    %170 = vmatprep.subr.bf16.mxu0 0
    %171 = vmatpush1.bf16.msra.mxu0 0
    %172 = vmatprep.subr.bf16.mxu0 0
    %173 = vmatpush1.bf16.msra.mxu0 0
    %174 = vmatprep.subr.bf16.mxu0 0
    %175 = vmatpush1.bf16.msra.mxu0 0
    %176 = vmatprep.subr.bf16.mxu0 0
    %177 = vmatpush1.bf16.msra.mxu0 0
    %178 = vmatprep.subr.bf16.mxu0 0
    %179 = vmatpush1.bf16.msra.mxu0 0
    %180 = vmatprep.subr.bf16.mxu0 0
    %181 = vmatpush1.bf16.msra.mxu0 0
    %182 = vmatprep.subr.bf16.mxu0 0
    %183 = vmatpush1.bf16.msra.mxu0 0
    %184 = vmatprep.subr.bf16.mxu0 0
    %185 = vmatpush1.bf16.msra.mxu0 0
    %186 = vmatprep.subr.bf16.mxu0 0
    %187 = vmatpush1.bf16.msra.mxu0 0
    %188 = vmatprep.subr.bf16.mxu0 0
    %189 = vmatpush1.bf16.msra.mxu0 0
    %190 = vmatprep.subr.bf16.mxu0 0
    %191 = vmatpush1.bf16.msra.mxu0 0
    %192 = vmatprep.mubr.bf16.mxu0 0
    %193 = vmatmul.mubr.bf16.gmra.mrb[0].mxu0 %v76
    %v194 = vpop.f32.mrb[0].mxu0
    %v195 = vadd.f32 %v45, %v194
    %v196 = vpop.f32.mrb[0].mxu0
    %v197 = vadd.f32 %v49, %v196
    %v198 = vpop.f32.mrb[0].mxu0
    %v199 = vadd.f32 %v45, %v198
    %v200 = vpop.f32.mrb[0].mxu0
    %v201 = vadd.f32 %v49, %v200
    %202 = vmatprep.mubr.bf16.mxu0 0
    %203 = vmatmul.mubr.bf16.gmra.mrb[0].mxu0 %v79
    %v204 = vpop.f32.mrb[0].mxu0
    %v205 = vadd.f32 %v45, %v204
    %v206 = vpop.f32.mrb[0].mxu0
    %v207 = vadd.f32 %v49, %v206
    %v208 = vpop.f32.mrb[0].mxu0
    %v209 = vadd.f32 %v45, %v208
    %v210 = vpop.f32.mrb[0].mxu0
    %v211 = vadd.f32 %v49, %v210
    %212 = vmatprep.mubr.bf16.mxu0 0
    %213 = vmatmul.mubr.bf16.gmra.mrb[0].mxu0 %v82
    %v214 = vpop.f32.mrb[0].mxu0
    %v215 = vadd.f32 %v45, %v214
    %v216 = vpop.f32.mrb[0].mxu0
    %v217 = vadd.f32 %v49, %v216
    %v218 = vpop.f32.mrb[0].mxu0
    %v219 = vadd.f32 %v45, %v218
    %v220 = vpop.f32.mrb[0].mxu0
    %v221 = vadd.f32 %v49, %v220
    %222 = vmatprep.mubr.bf16.mxu0 0
    %223 = vmatmul.mubr.bf16.gmra.mrb[0].mxu0 %v85
    %v224 = vpop.f32.mrb[0].mxu0
    %v225 = vadd.f32 %v45, %v224
    %v226 = vpop.f32.mrb[0].mxu0
    %v227 = vadd.f32 %v49, %v226
    %v228 = vpop.f32.mrb[0].mxu0
    %v229 = vadd.f32 %v45, %v228
    %v230 = vpop.f32.mrb[0].mxu0
    %v231 = vadd.f32 %v49, %v230
    %232 = vdwg.mxu0
    %233 = vst [vmem:[#allocation2] sm:$0xff] %v122
    %234 = vst [vmem:[#allocation2 + $0x8] sm:$0xff] %v124
    %235 = vst [vmem:[#allocation2 + $0x10] sm:$0xff] %v195
    %236 = vst [vmem:[#allocation2 + $0x18] sm:$0xff] %v197
    %237 = vst [vmem:[#allocation2 + $0x20] sm:$0xff] %v126
    %238 = vst [vmem:[#allocation2 + $0x28] sm:$0xff] %v128
    %239 = vst [vmem:[#allocation2 + $0x30] sm:$0xff] %v199
    %240 = vst [vmem:[#allocation2 + $0x38] sm:$0xff] %v201
    %241 = vst [vmem:[#allocation2 + $0x40] sm:$0xff] %v132
    %242 = vst [vmem:[#allocation2 + $0x48] sm:$0xff] %v134
    %243 = vst [vmem:[#allocation2 + $0x50] sm:$0xff] %v205
    %244 = vst [vmem:[#allocation2 + $0x58] sm:$0xff] %v207
    %245 = vst [vmem:[#allocation2 + $0x60] sm:$0xff] %v136
    %246 = vst [vmem:[#allocation2 + $0x68] sm:$0xff] %v138
    %247 = vst [vmem:[#allocation2 + $0x70] sm:$0xff] %v209
    %248 = vst [vmem:[#allocation2 + $0x78] sm:$0xff] %v211
    %249 = vst [vmem:[#allocation2 + $0x80] sm:$0xff] %v142
    %250 = vst [vmem:[#allocation2 + $0x88] sm:$0xff] %v144
    %251 = vst [vmem:[#allocation2 + $0x90] sm:$0xff] %v215
    %252 = vst [vmem:[#allocation2 + $0x98] sm:$0xff] %v217
    %253 = vst [vmem:[#allocation2 + $0xa0] sm:$0xff] %v146
    %254 = vst [vmem:[#allocation2 + $0xa8] sm:$0xff] %v148
    %255 = vst [vmem:[#allocation2 + $0xb0] sm:$0xff] %v219
    %256 = vst [vmem:[#allocation2 + $0xb8] sm:$0xff] %v221
    %257 = vst [vmem:[#allocation2 + $0xc0] sm:$0xff] %v152
    %258 = vst [vmem:[#allocation2 + $0xc8] sm:$0xff] %v154
    %259 = vst [vmem:[#allocation2 + $0xd0] sm:$0xff] %v225
    %260 = vst [vmem:[#allocation2 + $0xd8] sm:$0xff] %v227
    %261 = vst [vmem:[#allocation2 + $0xe0] sm:$0xff] %v156
    %262 = vst [vmem:[#allocation2 + $0xe8] sm:$0xff] %v158
    %263 = vst [vmem:[#allocation2 + $0xf0] sm:$0xff] %v229
    %264 = vst [vmem:[#allocation2 + $0xf8] sm:$0xff] %v231
    // Predicated region
    $region14: #{tpu_custom_call.1} parent=1 // pred_check
      _
    $region15: #{tpu_custom_call.1} parent=1 // pred_check_branch
      %266 = sbr.rel (0) target = $region17
    $region16: #{tpu_custom_call.1} parent=1 // pred_region
      %s268 = ssub.s32 4096, 4096
      %269 = vsyncadd [#allocation3], %s268
      %s270 = sshll.u32 [#allocation2], 4
      %s271 = int_to_ptr.vmem [resolvable:$true] %s270
      %276 = dma.vmem_to_hbm [thread:$0]  %s271, 4096, %s3, [#allocation3], 512, 512, 32
    $region17: #{tpu_custom_call.1} parent=1 // pred_fallthru
      _
    // Predicated region
    $region18: #{tpu_custom_call.1} parent=1 // pred_check
      _
    $region19: #{tpu_custom_call.1} parent=1 // pred_check_branch
      %278 = sbr.rel (0) target = $region21
    $region20: #{tpu_custom_call.1} parent=1 // pred_region
      %279 = dma.done [#allocation3], 4096
    $region21: #{tpu_custom_call.1} parent=1 // pred_fallthru
      _
    %280 = vsyncpa [#allocation3], 1

</llo_original>
